<compile_context>
chip_gen: v7x
topology: tpu7x:2x2x1
jax: 0.10.0
libtpu: 0.0.40
codegen_flags: <defaults>
</compile_context>

<pallas_src>
import functools

import jax
import jax.numpy as jnp
import numpy as np
from jax.experimental import pallas as pl
from jax.experimental.pallas import tpu as pltpu

EPS = 1e-5  # PyTorch InstanceNorm2d default eps


def _fused_kernel(xup_ref, pw_ref, g_ref, b_ref, emb_ref, o_ref,
                  sum_ref, ssq_ref, scale_ref, shift_ref, *, spatial_size):
    # xup_ref: (1, Cin, ts)   upsampled-input tile (flattened output spatial)
    # pw_ref : (Cin, Cout, ts) periodic per-position conv weights (resident)
    # g_ref, b_ref: (Cout, 1) InstanceNorm affine;  emb_ref: (1, Cout, 1)
    # o_ref  : (1, Cout, ts)
    # scratch: per-(sample, channel) sum / sumsq / fused scale / fused shift
    p = pl.program_id(1)
    t = pl.program_id(2)
    num_t = pl.num_programs(2)

    x = xup_ref[0]                      # (Cin, ts)
    pw = pw_ref[...]                    # (Cin, Cout, ts)
    cin = x.shape[0]

    # ConvTranspose2d(k=2, s=2) == upsampled input * periodic weight pattern.
    # Tiny Cin contraction -> VPU broadcast-multiply-add (keep the MXU out of it).
    y = x[0:1, :] * pw[0]               # (1, ts) * (Cout, ts) -> (Cout, ts)
    for ci in range(1, cin):
        y = y + x[ci:ci + 1, :] * pw[ci]

    # ---------------- phase 0: accumulate per-channel statistics ----------------
    @pl.when((p == 0) & (t == 0))
    def _init():
        sum_ref[...] = jnp.zeros_like(sum_ref)
        ssq_ref[...] = jnp.zeros_like(ssq_ref)

    @pl.when(p == 0)
    def _accumulate():
        sum_ref[...] += jnp.sum(y, axis=1, keepdims=True)
        ssq_ref[...] += jnp.sum(y * y, axis=1, keepdims=True)

    # Finalize: fold mean/var and the (gamma, beta) affine into one scale/shift.
    @pl.when((p == 0) & (t == num_t - 1))
    def _finalize():
        inv_n = 1.0 / float(spatial_size)
        mean = sum_ref[...] * inv_n
        var = ssq_ref[...] * inv_n - mean * mean      # biased, like PyTorch
        scale = g_ref[...] * jax.lax.rsqrt(var + EPS)
        scale_ref[...] = scale
        shift_ref[...] = b_ref[...] - mean * scale

    # -------- phase 1: normalize + ReLU + embedding add, write output tile --------
    @pl.when(p == 1)
    def _write():
        o_ref[0] = jnp.maximum(y * scale_ref[...] + shift_ref[...], 0.0) + emb_ref[0]


def conv_transpose_in_relu(x, t, w_ct, gamma, beta, w_lin, b_lin, *, tile_spatial=None):
    N, Cin, H, W = x.shape
    Cin_w, Cout, KH, KW = w_ct.shape
    assert Cin_w == Cin and KH == KW, "expected ConvTranspose2d weight (Cin, Cout, K, K)"
    K = KH
    OH, OW = H * K, W * K
    S = OH * OW

    # ---- spatial tile: divides S, multiple of K*OW (pattern period) and 128 (lanes) ----
    if tile_spatial is None:
        period = K * OW
        unit = int(np.lcm(period, 128))
        limit = max(unit, S // 2)            # keep >= 2 tiles/sample when possible
        ts = S                               # fallback: one tile per sample
        best, cand = 0, unit
        while cand <= min(S, limit):
            if S % cand == 0:
                best = cand
            cand += unit
        if best:
            ts = best
    else:
        ts = tile_spatial
    assert S % ts == 0, "spatial tile must divide OH*OW"
    T = S // ts

    # ---- cheap wrapper-side prep on SMALL tensors (all << conv output size) ----
    # 1) embedding branch hoisted out of the kernel: relu(t @ W^T + b) -> (N, Cout, 1)
    emb = jnp.maximum(t @ w_lin.T + b_lin, 0.0).reshape(N, Cout, 1).astype(jnp.float32)
    # 2) 2x nearest-neighbour upsample of X (so the kernel writes NCHW directly)
    xup = jnp.repeat(jnp.repeat(x, K, axis=2), K, axis=3).reshape(N, Cin, S)
    # 3) periodic per-position weight pattern over one spatial tile
    s_idx = jnp.arange(ts)
    pw = w_ct[:, :, (s_idx // OW) % K, s_idx % K]          # (Cin, Cout, ts)

    gamma2 = gamma.reshape(Cout, 1).astype(jnp.float32)
    beta2 = beta.reshape(Cout, 1).astype(jnp.float32)

    kernel = functools.partial(_fused_kernel, spatial_size=S)

    out_flat = pl.pallas_call(
        kernel,
        out_shape=jax.ShapeDtypeStruct((N, Cout, S), jnp.float32),
        grid_spec=pltpu.PrefetchScalarGridSpec(
            num_scalar_prefetch=0,
            grid=(N, 2, T),                                # (sample, phase, spatial tile)
            in_specs=[
                pl.BlockSpec((1, Cin, ts), lambda n, p, tt: (n, 0, tt)),     # xup
                pl.BlockSpec((Cin, Cout, ts), lambda n, p, tt: (0, 0, 0)),   # weight pattern
                pl.BlockSpec((Cout, 1), lambda n, p, tt: (0, 0)),            # gamma
                pl.BlockSpec((Cout, 1), lambda n, p, tt: (0, 0)),            # beta
                pl.BlockSpec((1, Cout, 1), lambda n, p, tt: (n, 0, 0)),      # embedding
            ],
            # phase 0 parks the output index at tile 0 (no valid data is ever flushed
            # before phase 1 overwrites it); phase 1 walks the tiles and writes.
            out_specs=pl.BlockSpec((1, Cout, ts), lambda n, p, tt: (n, 0, p * tt)),
            scratch_shapes=[
                pltpu.VMEM((Cout, 1), jnp.float32),   # sum
                pltpu.VMEM((Cout, 1), jnp.float32),   # sum of squares
                pltpu.VMEM((Cout, 1), jnp.float32),   # fused scale
                pltpu.VMEM((Cout, 1), jnp.float32),   # fused shift
            ],
        ),
        compiler_params=pltpu.CompilerParams(
            dimension_semantics=("parallel", "arbitrary", "arbitrary"),
            vmem_limit_bytes=32 * 1024 * 1024,
        ),
    )(xup, pw, gamma2, beta2, emb)

    return out_flat.reshape(N, Cout, OH, OW)


if __name__ == "__main__":
    key = jax.random.PRNGKey(0)
    kx, kt, kw, kl, kb, kg, kbt = jax.random.split(key, 7)

    N, Cin, H, W = 2, 4, 16, 16
    filters, Dt, K = 8, 8, 2

    x = jax.random.normal(kx, (N, Cin, H, W), jnp.float32)
    t = jax.random.normal(kt, (N, Dt), jnp.float32)

    # Parameters (shapes follow the PyTorch module); non-trivial affine to exercise fusion.
    w_ct = jax.random.normal(kw, (Cin, filters, K, K), jnp.float32) * 0.1   # ConvTranspose2d weight (Cin, Cout, kH, kW)
    gamma = 1.0 + 0.1 * jax.random.normal(kg, (filters,), jnp.float32)      # InstanceNorm2d affine
    beta = 0.1 * jax.random.normal(kbt, (filters,), jnp.float32)
    w_lin = jax.random.normal(kl, (filters, Dt), jnp.float32) * 0.1         # Linear weight (out, in)
    b_lin = jax.random.normal(kb, (filters,), jnp.float32) * 0.1            # Linear bias

    out = jax.jit(conv_transpose_in_relu)(x, t, w_ct, gamma, beta, w_lin, b_lin)
    out = jax.block_until_ready(out)

    # Pure-JAX reference (same semantics as the PyTorch forward, dropout disabled).
    y_ref = jnp.einsum("ncij,cokl->noikjl", x, w_ct).reshape(N, filters, H * K, W * K)
    mean = y_ref.mean(axis=(2, 3), keepdims=True)
    var = ((y_ref - mean) ** 2).mean(axis=(2, 3), keepdims=True)
    blk = jnp.maximum(
        (y_ref - mean) / jnp.sqrt(var + EPS) * gamma[None, :, None, None] + beta[None, :, None, None],
        0.0,
    )
    emb_ref = jnp.maximum(t @ w_lin.T + b_lin, 0.0)[:, :, None, None]
    ref = blk + emb_ref
    np.testing.assert_allclose(np.asarray(out), np.asarray(ref), rtol=1e-4, atol=1e-4)

    print("KERNEL_OK")
</pallas_src>

<mosaic_0001>
module attributes {stable_mosaic.version = 11 : i64} {
  func.func @_fused_kernel(%arg0: i32, %arg1: i32, %arg2: i32, %arg3: memref<1x4x512xf32, #tpu.memory_space<vmem>>, %arg4: memref<4x8x512xf32, #tpu.memory_space<vmem>>, %arg5: memref<8x1xf32, #tpu.memory_space<vmem>>, %arg6: memref<8x1xf32, #tpu.memory_space<vmem>>, %arg7: memref<1x8x1xf32, #tpu.memory_space<vmem>>, %arg8: memref<1x8x512xf32, #tpu.memory_space<vmem>>, %arg9: memref<8x1xf32, #tpu.memory_space<vmem>>, %arg10: memref<8x1xf32, #tpu.memory_space<vmem>>, %arg11: memref<8x1xf32, #tpu.memory_space<vmem>>, %arg12: memref<8x1xf32, #tpu.memory_space<vmem>>) attributes {dimension_semantics = [#tpu.dimension_semantics<parallel>, #tpu.dimension_semantics<arbitrary>, #tpu.dimension_semantics<arbitrary>], iteration_bounds = array<i64: 2, 2, 2>, scalar_prefetch = 0 : i64, scratch_operands = 4 : i64, tpu.core_type = #tpu.core_type<tc>, window_params = [{transform_indices = @transform_0, window_bounds = array<i64: 1, 4, 512>}, {pipeline_mode = #tpu.pipeline_mode<synchronous>, transform_indices = @transform_1, window_bounds = array<i64: 4, 8, 512>}, {pipeline_mode = #tpu.pipeline_mode<synchronous>, transform_indices = @transform_2, window_bounds = array<i64: 8, 1>}, {pipeline_mode = #tpu.pipeline_mode<synchronous>, transform_indices = @transform_3, window_bounds = array<i64: 8, 1>}, {transform_indices = @transform_4, window_bounds = array<i64: 1, 8, 1>}, {transform_indices = @transform_5, window_bounds = array<i64: 1, 8, 512>}]} {
    %c0 = arith.constant 0 : index
    %c0_0 = arith.constant 0 : index
    %c0_1 = arith.constant 0 : index
    %0 = vector.load %arg3[%c0, %c0_0, %c0_1] : memref<1x4x512xf32, #tpu.memory_space<vmem>>, vector<1x4x512xf32>
    %1 = vector.shape_cast %0 : vector<1x4x512xf32> to vector<4x512xf32>
    %c0_2 = arith.constant 0 : index
    %c0_3 = arith.constant 0 : index
    %c0_4 = arith.constant 0 : index
    %2 = vector.load %arg4[%c0_2, %c0_3, %c0_4] : memref<4x8x512xf32, #tpu.memory_space<vmem>>, vector<4x8x512xf32>
    %3 = vector.extract_strided_slice %1 {offsets = [0, 0], sizes = [1, 512], strides = [1, 1]} : vector<4x512xf32> to vector<1x512xf32>
    %4 = vector.extract_strided_slice %2 {offsets = [0, 0, 0], sizes = [1, 8, 512], strides = [1, 1, 1]} : vector<4x8x512xf32> to vector<1x8x512xf32>
    %5 = vector.shape_cast %4 : vector<1x8x512xf32> to vector<8x512xf32>
    %6 = vector.broadcast %3 : vector<1x512xf32> to vector<8x512xf32>
    %7 = arith.mulf %6, %5 : vector<8x512xf32>
    %8 = vector.extract_strided_slice %1 {offsets = [1, 0], sizes = [1, 512], strides = [1, 1]} : vector<4x512xf32> to vector<1x512xf32>
    %9 = vector.extract_strided_slice %2 {offsets = [1, 0, 0], sizes = [1, 8, 512], strides = [1, 1, 1]} : vector<4x8x512xf32> to vector<1x8x512xf32>
    %10 = vector.shape_cast %9 : vector<1x8x512xf32> to vector<8x512xf32>
    %11 = vector.broadcast %8 : vector<1x512xf32> to vector<8x512xf32>
    %12 = arith.mulf %11, %10 : vector<8x512xf32>
    %13 = arith.addf %7, %12 : vector<8x512xf32>
    %14 = vector.extract_strided_slice %1 {offsets = [2, 0], sizes = [1, 512], strides = [1, 1]} : vector<4x512xf32> to vector<1x512xf32>
    %15 = vector.extract_strided_slice %2 {offsets = [2, 0, 0], sizes = [1, 8, 512], strides = [1, 1, 1]} : vector<4x8x512xf32> to vector<1x8x512xf32>
    %16 = vector.shape_cast %15 : vector<1x8x512xf32> to vector<8x512xf32>
    %17 = vector.broadcast %14 : vector<1x512xf32> to vector<8x512xf32>
    %18 = arith.mulf %17, %16 : vector<8x512xf32>
    %19 = arith.addf %13, %18 : vector<8x512xf32>
    %20 = vector.extract_strided_slice %1 {offsets = [3, 0], sizes = [1, 512], strides = [1, 1]} : vector<4x512xf32> to vector<1x512xf32>
    %21 = vector.extract_strided_slice %2 {offsets = [3, 0, 0], sizes = [1, 8, 512], strides = [1, 1, 1]} : vector<4x8x512xf32> to vector<1x8x512xf32>
    %22 = vector.shape_cast %21 : vector<1x8x512xf32> to vector<8x512xf32>
    %23 = vector.broadcast %20 : vector<1x512xf32> to vector<8x512xf32>
    %24 = arith.mulf %23, %22 : vector<8x512xf32>
    %25 = arith.addf %19, %24 : vector<8x512xf32>
    %c0_i32 = arith.constant 0 : i32
    %26 = arith.cmpi eq, %arg1, %c0_i32 : i32
    %c0_i32_5 = arith.constant 0 : i32
    %27 = arith.cmpi eq, %arg2, %c0_i32_5 : i32
    %28 = arith.andi %26, %27 : i1
    %29 = arith.extui %28 : i1 to i32
    %c0_i32_6 = arith.constant 0 : i32
    %30 = arith.cmpi ne, %29, %c0_i32_6 : i32
    scf.if %30 {
      %cst = arith.constant 0.000000e+00 : f32
      %42 = vector.broadcast %cst : f32 to vector<8x1xf32>
      %c0_13 = arith.constant 0 : index
      %c0_14 = arith.constant 0 : index
      %43 = vector.load %arg9[%c0_13, %c0_14] : memref<8x1xf32, #tpu.memory_space<vmem>>, vector<8x1xf32>
      tpu.vector_store %arg9[%c0_13, %c0_14], %42 {strides = array<i32>} : memref<8x1xf32, #tpu.memory_space<vmem>>, vector<8x1xf32>,
      %cst_15 = arith.constant 0.000000e+00 : f32
      %44 = vector.broadcast %cst_15 : f32 to vector<8x1xf32>
      %c0_16 = arith.constant 0 : index
      %c0_17 = arith.constant 0 : index
      %45 = vector.load %arg10[%c0_16, %c0_17] : memref<8x1xf32, #tpu.memory_space<vmem>>, vector<8x1xf32>
      tpu.vector_store %arg10[%c0_16, %c0_17], %44 {strides = array<i32>} : memref<8x1xf32, #tpu.memory_space<vmem>>, vector<8x1xf32>,
    } else {
    }
    %c0_i32_7 = arith.constant 0 : i32
    %31 = arith.cmpi eq, %arg1, %c0_i32_7 : i32
    %32 = arith.extui %31 : i1 to i32
    %c0_i32_8 = arith.constant 0 : i32
    %33 = arith.cmpi ne, %32, %c0_i32_8 : i32
    scf.if %33 {
      %c0_13 = arith.constant 0 : index
      %c0_14 = arith.constant 0 : index
      %42 = vector.load %arg9[%c0_13, %c0_14] : memref<8x1xf32, #tpu.memory_space<vmem>>, vector<8x1xf32>
      %cst = arith.constant dense<0.000000e+00> : vector<8xf32>
      %43 = vector.multi_reduction <add>, %25, %cst [1] : vector<8x512xf32> to vector<8xf32>
      %44 = vector.shape_cast %43 : vector<8xf32> to vector<8x1xf32>
      %45 = arith.addf %42, %44 : vector<8x1xf32>
      %c0_15 = arith.constant 0 : index
      %c0_16 = arith.constant 0 : index
      %46 = vector.load %arg9[%c0_15, %c0_16] : memref<8x1xf32, #tpu.memory_space<vmem>>, vector<8x1xf32>
      tpu.vector_store %arg9[%c0_15, %c0_16], %45 {strides = array<i32>} : memref<8x1xf32, #tpu.memory_space<vmem>>, vector<8x1xf32>,
      %c0_17 = arith.constant 0 : index
      %c0_18 = arith.constant 0 : index
      %47 = vector.load %arg10[%c0_17, %c0_18] : memref<8x1xf32, #tpu.memory_space<vmem>>, vector<8x1xf32>
      %48 = arith.mulf %25, %25 : vector<8x512xf32>
      %cst_19 = arith.constant dense<0.000000e+00> : vector<8xf32>
      %49 = vector.multi_reduction <add>, %48, %cst_19 [1] : vector<8x512xf32> to vector<8xf32>
      %50 = vector.shape_cast %49 : vector<8xf32> to vector<8x1xf32>
      %51 = arith.addf %47, %50 : vector<8x1xf32>
      %c0_20 = arith.constant 0 : index
      %c0_21 = arith.constant 0 : index
      %52 = vector.load %arg10[%c0_20, %c0_21] : memref<8x1xf32, #tpu.memory_space<vmem>>, vector<8x1xf32>
      tpu.vector_store %arg10[%c0_20, %c0_21], %51 {strides = array<i32>} : memref<8x1xf32, #tpu.memory_space<vmem>>, vector<8x1xf32>,
    } else {
    }
    %c0_i32_9 = arith.constant 0 : i32
    %34 = arith.cmpi eq, %arg1, %c0_i32_9 : i32
    %c1_i32 = arith.constant 1 : i32
    %35 = arith.cmpi eq, %arg2, %c1_i32 : i32
    %36 = arith.andi %34, %35 : i1
    %37 = arith.extui %36 : i1 to i32
    %c0_i32_10 = arith.constant 0 : i32
    %38 = arith.cmpi ne, %37, %c0_i32_10 : i32
    scf.if %38 {
      %c0_13 = arith.constant 0 : index
      %c0_14 = arith.constant 0 : index
      %42 = vector.load %arg9[%c0_13, %c0_14] : memref<8x1xf32, #tpu.memory_space<vmem>>, vector<8x1xf32>
      %cst = arith.constant 9.765625E-4 : f32
      %43 = vector.broadcast %cst : f32 to vector<8x1xf32>
      %44 = arith.mulf %42, %43 : vector<8x1xf32>
      %c0_15 = arith.constant 0 : index
      %c0_16 = arith.constant 0 : index
      %45 = vector.load %arg10[%c0_15, %c0_16] : memref<8x1xf32, #tpu.memory_space<vmem>>, vector<8x1xf32>
      %cst_17 = arith.constant 9.765625E-4 : f32
      %46 = vector.broadcast %cst_17 : f32 to vector<8x1xf32>
      %47 = arith.mulf %45, %46 : vector<8x1xf32>
      %48 = arith.mulf %44, %44 : vector<8x1xf32>
      %49 = arith.subf %47, %48 : vector<8x1xf32>
      %c0_18 = arith.constant 0 : index
      %c0_19 = arith.constant 0 : index
      %50 = vector.load %arg5[%c0_18, %c0_19] : memref<8x1xf32, #tpu.memory_space<vmem>>, vector<8x1xf32>
      %cst_20 = arith.constant 9.99999974E-6 : f32
      %51 = vector.broadcast %cst_20 : f32 to vector<8x1xf32>
      %52 = arith.addf %49, %51 : vector<8x1xf32>
      %53 = math.rsqrt %52 : vector<8x1xf32>
      %54 = arith.mulf %50, %53 : vector<8x1xf32>
      %c0_21 = arith.constant 0 : index
      %c0_22 = arith.constant 0 : index
      %55 = vector.load %arg11[%c0_21, %c0_22] : memref<8x1xf32, #tpu.memory_space<vmem>>, vector<8x1xf32>
      tpu.vector_store %arg11[%c0_21, %c0_22], %54 {strides = array<i32>} : memref<8x1xf32, #tpu.memory_space<vmem>>, vector<8x1xf32>,
      %c0_23 = arith.constant 0 : index
      %c0_24 = arith.constant 0 : index
      %56 = vector.load %arg6[%c0_23, %c0_24] : memref<8x1xf32, #tpu.memory_space<vmem>>, vector<8x1xf32>
      %57 = arith.mulf %44, %54 : vector<8x1xf32>
      %58 = arith.subf %56, %57 : vector<8x1xf32>
      %c0_25 = arith.constant 0 : index
      %c0_26 = arith.constant 0 : index
      %59 = vector.load %arg12[%c0_25, %c0_26] : memref<8x1xf32, #tpu.memory_space<vmem>>, vector<8x1xf32>
      tpu.vector_store %arg12[%c0_25, %c0_26], %58 {strides = array<i32>} : memref<8x1xf32, #tpu.memory_space<vmem>>, vector<8x1xf32>,
    } else {
    }
    %c1_i32_11 = arith.constant 1 : i32
    %39 = arith.cmpi eq, %arg1, %c1_i32_11 : i32
    %40 = arith.extui %39 : i1 to i32
    %c0_i32_12 = arith.constant 0 : i32
    %41 = arith.cmpi ne, %40, %c0_i32_12 : i32
    scf.if %41 {
      %c0_13 = arith.constant 0 : index
      %c0_14 = arith.constant 0 : index
      %42 = vector.load %arg11[%c0_13, %c0_14] : memref<8x1xf32, #tpu.memory_space<vmem>>, vector<8x1xf32>
      %43 = vector.broadcast %42 : vector<8x1xf32> to vector<8x512xf32>
      %44 = arith.mulf %25, %43 : vector<8x512xf32>
      %c0_15 = arith.constant 0 : index
      %c0_16 = arith.constant 0 : index
      %45 = vector.load %arg12[%c0_15, %c0_16] : memref<8x1xf32, #tpu.memory_space<vmem>>, vector<8x1xf32>
      %46 = vector.broadcast %45 : vector<8x1xf32> to vector<8x512xf32>
      %47 = arith.addf %44, %46 : vector<8x512xf32>
      %cst = arith.constant 0.000000e+00 : f32
      %48 = vector.broadcast %cst : f32 to vector<8x512xf32>
      %49 = arith.maximumf %47, %48 : vector<8x512xf32>
      %c0_17 = arith.constant 0 : index
      %c0_18 = arith.constant 0 : index
      %c0_19 = arith.constant 0 : index
      %50 = vector.load %arg7[%c0_17, %c0_18, %c0_19] : memref<1x8x1xf32, #tpu.memory_space<vmem>>, vector<1x8x1xf32>
      %51 = vector.shape_cast %50 : vector<1x8x1xf32> to vector<8x1xf32>
      %52 = vector.broadcast %51 : vector<8x1xf32> to vector<8x512xf32>
      %53 = arith.addf %49, %52 : vector<8x512xf32>
      %c0_20 = arith.constant 0 : index
      %c0_21 = arith.constant 0 : index
      %c0_22 = arith.constant 0 : index
      %54 = vector.load %arg8[%c0_20, %c0_21, %c0_22] : memref<1x8x512xf32, #tpu.memory_space<vmem>>, vector<1x8x512xf32>
      %55 = vector.shape_cast %54 : vector<1x8x512xf32> to vector<8x512xf32>
      %56 = vector.shape_cast %53 : vector<8x512xf32> to vector<1x8x512xf32>
      tpu.vector_store %arg8[%c0_20, %c0_21, %c0_22], %56 {strides = array<i32>} : memref<1x8x512xf32, #tpu.memory_space<vmem>>, vector<1x8x512xf32>,
    } else {
    }
    return
  }
  func.func @transform_0(%arg0: i32, %arg1: i32, %arg2: i32) -> (i32, i32, i32) {
    %c0_i32 = arith.constant 0 : i32
    %c0_i32_0 = arith.constant 0 : i32
    return %arg0, %c0_i32, %arg2 : i32, i32, i32
  }
  func.func @transform_1(%arg0: i32, %arg1: i32, %arg2: i32) -> (i32, i32, i32) {
    %c0_i32 = arith.constant 0 : i32
    %c0_i32_0 = arith.constant 0 : i32
    %c0_i32_1 = arith.constant 0 : i32
    %c0_i32_2 = arith.constant 0 : i32
    return %c0_i32, %c0_i32_0, %c0_i32_1 : i32, i32, i32
  }
  func.func @transform_2(%arg0: i32, %arg1: i32, %arg2: i32) -> (i32, i32) {
    %c0_i32 = arith.constant 0 : i32
    %c0_i32_0 = arith.constant 0 : i32
    %c0_i32_1 = arith.constant 0 : i32
    return %c0_i32, %c0_i32_0 : i32, i32
  }
  func.func @transform_3(%arg0: i32, %arg1: i32, %arg2: i32) -> (i32, i32) {
    %c0_i32 = arith.constant 0 : i32
    %c0_i32_0 = arith.constant 0 : i32
    %c0_i32_1 = arith.constant 0 : i32
    return %c0_i32, %c0_i32_0 : i32, i32
  }
  func.func @transform_4(%arg0: i32, %arg1: i32, %arg2: i32) -> (i32, i32, i32) {
    %c0_i32 = arith.constant 0 : i32
    %c0_i32_0 = arith.constant 0 : i32
    %c0_i32_1 = arith.constant 0 : i32
    return %arg0, %c0_i32, %c0_i32_0 : i32, i32, i32
  }
  func.func @transform_5(%arg0: i32, %arg1: i32, %arg2: i32) -> (i32, i32, i32) {
    %0 = arith.muli %arg1, %arg2 : i32
    %c0_i32 = arith.constant 0 : i32
    %c0_i32_0 = arith.constant 0 : i32
    return %arg0, %c0_i32, %0 : i32, i32, i32
  }
}

</mosaic_0001>

<llo_original>
// kernel: conv_transpose_in_relu.1
$region0: #{conv_transpose_in_relu.1}
  #allocation0 [shape = 'u32[]', space=smem, size = 0x4, offset = 0x4, fixed_abs, tag = 'smem constant byte address 0x4 - core index']
  #allocation1 [shape = 'u32[144,128]{1,0:T(1,128)}', space=vmem, size = 0x12000, scoped, tag = 'internal scratch']
  #allocation2 [shape = 'f32[8,1]{1,0:T(8,128)}', space=vmem, size = 0x1000, scoped, tag = 'scratch operand']
  #allocation3 [shape = 'f32[8,1]{1,0:T(8,128)}', space=vmem, size = 0x1000, scoped, tag = 'scratch operand']
  #allocation4 [shape = 'f32[8,1]{1,0:T(8,128)}', space=vmem, size = 0x1000, scoped, tag = 'scratch operand']
  #allocation5 [shape = 'f32[8,1]{1,0:T(8,128)}', space=vmem, size = 0x1000, scoped, tag = 'scratch operand']
  %s0 = inlined_call_operand.vmem [shape: f32[2,4,1024], index: 0, kind: input, shape index: {}]
  %s1 = inlined_call_operand.vmem [shape: f32[4,8,512], index: 1, kind: input, shape index: {}]
  %s2 = inlined_call_operand.vmem [shape: f32[8,1], index: 2, kind: input, shape index: {}]
  %s3 = inlined_call_operand.vmem [shape: f32[8,1], index: 3, kind: input, shape index: {}]
  %s4 = inlined_call_operand.vmem [shape: f32[2,8,1], index: 4, kind: input, shape index: {}]
  %s5 = inlined_call_operand.vmem [shape: f32[2,8,1024], index: 5, kind: output, shape index: {}]
  %s6 = sld [smem:[#allocation0]]
  $region69: #{conv_transpose_in_relu.1} parent=0
    _
  %s8 = ssub.s32 1, %s6
  %s9 = scalar_select 0, %s8, %s6
  loop: start=0, step=1, limit=10
  $region2: #{conv_transpose_in_relu.1} parent=0 // loop_pre_header
    _
  $region3: #{conv_transpose_in_relu.1} parent=0 // loop_header
    %s11 = sphi 0, %s15
    %p12 = scmp.ge.s32.totalorder %s11, 10
    %s18 = sphi 0, %s37
    %s19 = sphi 0, %s33
    %s20 = sphi 0, %s29
    %s21 = sphi 0, %s18
    %s22 = sphi 0, %s19
    %s23 = sphi 0, %s20
    %s24 = sphi 0, %s21
    %s25 = sphi 0, %s22
    %s26 = sphi 0, %s23
    %s42 = sphi 0, %s44
    %s45 = sphi 0, %s42
    %s46 = sphi 0, %s45
    %s62 = sphi 0, %s46
    %s66 = sphi 0, %s66
    %s68 = sphi 0, %s66
    %s69 = sphi 0, %s68
    %s83 = sphi 0, %s69
    %s87 = sphi 0, %s87
    %s89 = sphi 0, %s87
    %s90 = sphi 0, %s89
    %s104 = sphi 0, %s90
    %s108 = sphi 0, %s108
    %s110 = sphi 0, %s108
    %s111 = sphi 0, %s110
    %s125 = sphi 0, %s111
    %s131 = sphi 0, %s133
    %s134 = sphi 0, %s131
    %s135 = sphi 0, %s134
    %s151 = sphi 0, %s135
    %s161 = sphi 0, %s163
    %s164 = sphi 0, %s161
    %s165 = sphi 0, %s164
    %s181 = sphi 0, %s165
  $region4: #{conv_transpose_in_relu.1} parent=0 // loop_header_branch
    %14 = sbr.rel (%p12) target = $region8
  $region5: #{conv_transpose_in_relu.1} parent=0 // loop_body
    %s16 = ssub.s32 %s11, 1
    %s17 = ssub.s32 %s11, 2
    %s27 = sadd.s32 1, %s20
    %p28 = scmp.ge.s32.totalorder %s27, 2
    %s29 = scalar_select %p28, 0, %s27
    %s30 = sadd.s32 1, %s19
    %s31 = scalar_select %p28, %s30, %s19
    %p32 = scmp.ge.s32.totalorder %s31, 2
    %s33 = scalar_select %p32, 0, %s31
    %s34 = sadd.s32 1, %s18
    %s35 = scalar_select %p32, %s34, %s18
    %p36 = scmp.ge.s32.totalorder %s35, 2
    %s37 = scalar_select %p36, 0, %s35
    %s38 = ssub.s32 %s18, %s37
    %s39 = ssub.s32 %s20, %s29
    %s40 = sor.u32 %s38, %s39
    %p41 = scmp.eq.s32.totalorder %s40, 0
    %s43 = sadd.s32 %s42, 1
    %s44 = scalar_select %p41, %s42, %s43
    %p47 = pneg %p41
    %p48 = scmp.eq.s32.totalorder %s11, 7
    %p49 = por %p47, %p48
    %p50 = scmp.ne.s32.totalorder %s42, %s45
    %p51 = scmp.eq.s32.totalorder %s11, 0
    %p52 = por %p50, %p51
    %p53 = scmp.ne.s32.totalorder %s42, %s45
    %p54 = scmp.eq.s32.totalorder %s16, 7
    %p55 = por %p53, %p54
    %p56 = scmp.ne.s32.totalorder %s45, %s46
    %p57 = scmp.eq.s32.totalorder %s16, 0
    %p58 = por %p56, %p57
    %p59 = scmp.ne.s32.totalorder %s45, %s46
    %p60 = scmp.eq.s32.totalorder %s17, 7
    %p61 = por %p59, %p60
    %p63 = scmp.ne.s32.totalorder %s46, %s62
    %p64 = scmp.eq.s32.totalorder %s17, 0
    %p65 = por %p63, %p64
    %s67 = sadd.s32 %s66, 1
    %p70 = scmp.eq.s32.totalorder %s11, 7
    %p71 = scmp.ne.s32.totalorder %s66, %s68
    %p72 = scmp.eq.s32.totalorder %s11, 0
    %p73 = por %p71, %p72
    %p74 = scmp.ne.s32.totalorder %s66, %s68
    %p75 = scmp.eq.s32.totalorder %s16, 7
    %p76 = por %p74, %p75
    %p77 = scmp.ne.s32.totalorder %s68, %s69
    %p78 = scmp.eq.s32.totalorder %s16, 0
    %p79 = por %p77, %p78
    %p80 = scmp.ne.s32.totalorder %s68, %s69
    %p81 = scmp.eq.s32.totalorder %s17, 7
    %p82 = por %p80, %p81
    %p84 = scmp.ne.s32.totalorder %s69, %s83
    %p85 = scmp.eq.s32.totalorder %s17, 0
    %p86 = por %p84, %p85
    %s88 = sadd.s32 %s87, 1
    %p91 = scmp.eq.s32.totalorder %s11, 7
    %p92 = scmp.ne.s32.totalorder %s87, %s89
    %p93 = scmp.eq.s32.totalorder %s11, 0
    %p94 = por %p92, %p93
    %p95 = scmp.ne.s32.totalorder %s87, %s89
    %p96 = scmp.eq.s32.totalorder %s16, 7
    %p97 = por %p95, %p96
    %p98 = scmp.ne.s32.totalorder %s89, %s90
    %p99 = scmp.eq.s32.totalorder %s16, 0
    %p100 = por %p98, %p99
    %p101 = scmp.ne.s32.totalorder %s89, %s90
    %p102 = scmp.eq.s32.totalorder %s17, 7
    %p103 = por %p101, %p102
    %p105 = scmp.ne.s32.totalorder %s90, %s104
    %p106 = scmp.eq.s32.totalorder %s17, 0
    %p107 = por %p105, %p106
    %s109 = sadd.s32 %s108, 1
    %p112 = scmp.eq.s32.totalorder %s11, 7
    %p113 = scmp.ne.s32.totalorder %s108, %s110
    %p114 = scmp.eq.s32.totalorder %s11, 0
    %p115 = por %p113, %p114
    %p116 = scmp.ne.s32.totalorder %s108, %s110
    %p117 = scmp.eq.s32.totalorder %s16, 7
    %p118 = por %p116, %p117
    %p119 = scmp.ne.s32.totalorder %s110, %s111
    %p120 = scmp.eq.s32.totalorder %s16, 0
    %p121 = por %p119, %p120
    %p122 = scmp.ne.s32.totalorder %s110, %s111
    %p123 = scmp.eq.s32.totalorder %s17, 7
    %p124 = por %p122, %p123
    %p126 = scmp.ne.s32.totalorder %s111, %s125
    %p127 = scmp.eq.s32.totalorder %s17, 0
    %p128 = por %p126, %p127
    %s129 = ssub.s32 %s18, %s37
    %p130 = scmp.eq.s32.totalorder %s129, 0
    %s132 = sadd.s32 %s131, 1
    %s133 = scalar_select %p130, %s131, %s132
    %p136 = pneg %p130
    %p137 = scmp.eq.s32.totalorder %s11, 7
    %p138 = por %p136, %p137
    %p139 = scmp.ne.s32.totalorder %s131, %s134
    %p140 = scmp.eq.s32.totalorder %s11, 0
    %p141 = por %p139, %p140
    %p142 = scmp.ne.s32.totalorder %s131, %s134
    %p143 = scmp.eq.s32.totalorder %s16, 7
    %p144 = por %p142, %p143
    %p145 = scmp.ne.s32.totalorder %s134, %s135
    %p146 = scmp.eq.s32.totalorder %s16, 0
    %p147 = por %p145, %p146
    %p148 = scmp.ne.s32.totalorder %s134, %s135
    %p149 = scmp.eq.s32.totalorder %s17, 7
    %p150 = por %p148, %p149
    %p152 = scmp.ne.s32.totalorder %s135, %s151
    %p153 = scmp.eq.s32.totalorder %s17, 0
    %p154 = por %p152, %p153
    %s155 = smul.u32 %s19, %s20
    %s156 = smul.u32 %s33, %s29
    %s157 = ssub.s32 %s18, %s37
    %s158 = ssub.s32 %s155, %s156
    %s159 = sor.u32 %s157, %s158
    %p160 = scmp.eq.s32.totalorder %s159, 0
    %s162 = sadd.s32 %s161, 1
    %s163 = scalar_select %p160, %s161, %s162
    %p166 = pneg %p160
    %p167 = scmp.eq.s32.totalorder %s11, 7
    %p168 = por %p166, %p167
    %p169 = scmp.ne.s32.totalorder %s161, %s164
    %p170 = scmp.eq.s32.totalorder %s11, 0
    %p171 = por %p169, %p170
    %p172 = scmp.ne.s32.totalorder %s161, %s164
    %p173 = scmp.eq.s32.totalorder %s16, 7
    %p174 = por %p172, %p173
    %p175 = scmp.ne.s32.totalorder %s164, %s165
    %p176 = scmp.eq.s32.totalorder %s16, 0
    %p177 = por %p175, %p176
    %p178 = scmp.ne.s32.totalorder %s164, %s165
    %p179 = scmp.eq.s32.totalorder %s17, 7
    %p180 = por %p178, %p179
    %p182 = scmp.ne.s32.totalorder %s165, %s181
    %p183 = scmp.eq.s32.totalorder %s17, 0
    %p184 = por %p182, %p183
    %p185 = scmp.le.s32.totalorder 1, %s11
    %p186 = scmp.lt.s32.totalorder %s11, 9
    %p187 = pnand %p185, %p186
    %p188 = pneg %p187
    // Predicated region
    $region9: #{conv_transpose_in_relu.1} parent=5 // pred_check
      _
    $region10: #{conv_transpose_in_relu.1} parent=5 // pred_check_branch
      %190 = sbr.rel (%p187) target = $region12
    $region11: #{conv_transpose_in_relu.1} parent=5 // pred_region
      %s191 = ssub.s32 %s11, 1
      // Predicated region
      $region13: #{conv_transpose_in_relu.1} parent=11 // pred_check
        %p192 = pneg %p79
      $region14: #{conv_transpose_in_relu.1} parent=11 // pred_check_branch
        %194 = sbr.rel (%p192) target = $region16
      $region15: #{conv_transpose_in_relu.1} parent=11 // pred_region
        _
      $region16: #{conv_transpose_in_relu.1} parent=11 // pred_fallthru
        _
      // Predicated region
      $region17: #{conv_transpose_in_relu.1} parent=11 // pred_check
        %p195 = pneg %p100
      $region18: #{conv_transpose_in_relu.1} parent=11 // pred_check_branch
        %197 = sbr.rel (%p195) target = $region20
      $region19: #{conv_transpose_in_relu.1} parent=11 // pred_region
        _
      $region20: #{conv_transpose_in_relu.1} parent=11 // pred_fallthru
        _
      // Predicated region
      $region21: #{conv_transpose_in_relu.1} parent=11 // pred_check
        %p198 = pneg %p121
      $region22: #{conv_transpose_in_relu.1} parent=11 // pred_check_branch
        %200 = sbr.rel (%p198) target = $region24
      $region23: #{conv_transpose_in_relu.1} parent=11 // pred_region
        _
      $region24: #{conv_transpose_in_relu.1} parent=11 // pred_fallthru
        _
    $region12: #{conv_transpose_in_relu.1} parent=5 // pred_fallthru
      _
    %p201 = scmp.lt.s32.totalorder %s11, 8
    // Predicated region
    $region25: #{conv_transpose_in_relu.1} parent=5 // pred_check
      %p202 = pneg %p201
    $region26: #{conv_transpose_in_relu.1} parent=5 // pred_check_branch
      %204 = sbr.rel (%p202) target = $region28
    $region27: #{conv_transpose_in_relu.1} parent=5 // pred_region
      // Predicated region
      $region29: #{conv_transpose_in_relu.1} parent=27 // pred_check
        %p205 = pneg %p52
      $region30: #{conv_transpose_in_relu.1} parent=27 // pred_check_branch
        %207 = sbr.rel (%p205) target = $region32
      $region31: #{conv_transpose_in_relu.1} parent=27 // pred_region
        %s208 = smul.u32 4, %s20
        %p209 = scmp.lt.s32.totalorder %s18, 1
        %s210 = scalar_select %p209, %s18, 1
        %p211 = scmp.lt.s32.totalorder %s208, 7
        %s212 = scalar_select %p211, %s208, 7
        %s213 = smul.addr %s210, 8
        %s214 = sadd.s32 %s212, %s213
        %s215 = smul.addr %s214, 4
        %s216 = scalar_lea.vmem %s0, %s215
        %s217 = smul.u32 4, %s20
      $region32: #{conv_transpose_in_relu.1} parent=27 // pred_fallthru
        _
      // Predicated region
      $region33: #{conv_transpose_in_relu.1} parent=27 // pred_check
        %p218 = pneg %p141
      $region34: #{conv_transpose_in_relu.1} parent=27 // pred_check_branch
        %220 = sbr.rel (%p218) target = $region36
      $region35: #{conv_transpose_in_relu.1} parent=27 // pred_region
        %p221 = scmp.lt.s32.totalorder %s18, 1
        %s222 = scalar_select %p221, %s18, 1
        %s223 = smul.addr %s222, 8
        %s224 = scalar_lea.vmem %s4, %s223
      $region36: #{conv_transpose_in_relu.1} parent=27 // pred_fallthru
        _
    $region28: #{conv_transpose_in_relu.1} parent=5 // pred_fallthru
      _
    %p225 = scmp.le.s32.totalorder 1, %s11
    %p226 = scmp.lt.s32.totalorder %s11, 9
    %p227 = pnand %p225, %p226
    %p228 = pneg %p227
    // Predicated region
    $region37: #{conv_transpose_in_relu.1} parent=5 // pred_check
      _
    $region38: #{conv_transpose_in_relu.1} parent=5 // pred_check_branch
      %230 = sbr.rel (%p227) target = $region40
    $region39: #{conv_transpose_in_relu.1} parent=5 // pred_region
      %s231 = ssub.s32 %s11, 1
      %s232 = smul.u32 4, %s23
      %p233 = scmp.lt.s32.totalorder %s21, 1
      %s234 = scalar_select %p233, %s21, 1
      %p235 = scmp.lt.s32.totalorder %s232, 7
      %s236 = scalar_select %p235, %s232, 7
      %s237 = smul.addr %s234, 8
      %s238 = sadd.s32 %s236, %s237
      %s239 = smul.addr %s238, 4
      %s240 = scalar_lea.vmem %s0, %s239
      %p241 = pneg %p58
      %p242 = pneg %p55
      %p243 = pneg %p79
      %p244 = pneg %p76
      %p245 = pneg %p100
      %p246 = pneg %p97
      %p247 = pneg %p121
      %p248 = pneg %p118
      %p249 = scmp.lt.s32.totalorder %s21, 1
      %s250 = scalar_select %p249, %s21, 1
      %s251 = smul.addr %s250, 8
      %s252 = scalar_lea.vmem %s4, %s251
      %p253 = pneg %p147
      %p254 = pneg %p144
      %p255 = pneg %p177
      %p256 = pneg %p174
      %s257 = smul.u32 %s22, %s23
      %s258 = smul.u32 4, %s257
      %p259 = scmp.lt.s32.totalorder %s21, 1
      %s260 = scalar_select %p259, %s21, 1
      %p261 = scmp.lt.s32.totalorder %s258, 7
      %s262 = scalar_select %p261, %s258, 7
      %s263 = smul.addr %s260, 8
      %s264 = sadd.s32 %s262, %s263
      %s265 = smul.addr %s264, 8
      %s266 = scalar_lea.vmem %s5, %s265
      %s267 = smul.u32 4, %s23
      %p268 = scmp.lt.s32.totalorder %s21, 1
      %s269 = scalar_select %p268, %s21, 1
      %p270 = scmp.lt.s32.totalorder %s267, 7
      %s271 = scalar_select %p270, %s267, 7
      %s272 = smul.addr %s269, 8
      %s273 = sadd.s32 %s271, %s272
      %s274 = smul.addr %s273, 4
      %s275 = scalar_lea.vmem %s0, %s274
      %s276 = smul.u32 4, %s23
      %p277 = scmp.lt.s32.totalorder %s21, 1
      %s278 = scalar_select %p277, %s21, 1
      %s279 = smul.addr %s278, 8
      %s280 = scalar_lea.vmem %s4, %s279
      %s281 = smul.u32 %s22, %s23
      %s282 = smul.u32 4, %s281
      %p283 = scmp.lt.s32.totalorder %s21, 1
      %s284 = scalar_select %p283, %s21, 1
      %p285 = scmp.lt.s32.totalorder %s282, 7
      %s286 = scalar_select %p285, %s282, 7
      %s287 = smul.addr %s284, 8
      %s288 = sadd.s32 %s286, %s287
      %s289 = smul.addr %s288, 8
      %s290 = scalar_lea.vmem %s5, %s289
      %s291 = smul.u32 %s22, %s23
      %s292 = smul.u32 4, %s291
      %v293 = vld [vmem:[%s275] sm:$0xff]
      %v294 = vld [vmem:[%s275 + $0x8] sm:$0xff]
      %v295 = vld [vmem:[%s1] sm:$0xff]
      %v296 = vld [vmem:[%s1 + $0x8] sm:$0xff]
      %v297 = vld [vmem:[%s1 + $0x10] sm:$0xff]
      %v298 = vld [vmem:[%s1 + $0x18] sm:$0xff]
      %v299 = vld [vmem:[%s1 + $0x20] sm:$0xff]
      %v300 = vld [vmem:[%s1 + $0x28] sm:$0xff]
      %v301 = vld [vmem:[%s1 + $0x30] sm:$0xff]
      %v302 = vld [vmem:[%s1 + $0x38] sm:$0xff]
      %v303 = vld [vmem:[%s1 + $0x40] sm:$0xff]
      %v304 = vld [vmem:[%s1 + $0x48] sm:$0xff]
      %v305 = vld [vmem:[%s1 + $0x50] sm:$0xff]
      %v306 = vld [vmem:[%s1 + $0x58] sm:$0xff]
      %v307 = vld [vmem:[%s1 + $0x60] sm:$0xff]
      %v308 = vld [vmem:[%s1 + $0x68] sm:$0xff]
      %v309 = vld [vmem:[%s1 + $0x70] sm:$0xff]
      %v310 = vld [vmem:[%s1 + $0x78] sm:$0xff]
      %v313 = vlaneseq
      %v314 = vshrl.u32 %v313, 7
      %v315 = vsub.s32 0, %v314
      %v316 = vrot.slane %v293, %v315
      %v317 = vlaneseq
      %v318 = vshrl.u32 %v317, 7
      %v319 = vsub.s32 4, %v318
      %v320 = vrot.slane %v293, %v319
      %v321 = vlaneseq
      %v322 = vshrl.u32 %v321, 7
      %v323 = vsub.s32 0, %v322
      %v324 = vrot.slane %v294, %v323
      %v325 = vlaneseq
      %v326 = vshrl.u32 %v325, 7
      %v327 = vsub.s32 4, %v326
      %v328 = vrot.slane %v294, %v327
      %v333 = vlaneseq
      %v334 = vshrl.u32 %v333, 7
      %v335 = vsub.s32 0, %v334
      %v336 = vrot.slane %v316, %v335
      %v337 = vlaneseq
      %v338 = vshrl.u32 %v337, 7
      %v339 = vsub.s32 0, %v338
      %v340 = vrot.slane %v320, %v339
      %v341 = vlaneseq
      %v342 = vshrl.u32 %v341, 7
      %v343 = vsub.s32 0, %v342
      %v344 = vrot.slane %v324, %v343
      %v345 = vlaneseq
      %v346 = vshrl.u32 %v345, 7
      %v347 = vsub.s32 0, %v346
      %v348 = vrot.slane %v328, %v347
      %v349 = vmul.f32 %v336, %v295
      %v350 = vmul.f32 %v340, %v296
      %v351 = vmul.f32 %v344, %v297
      %v352 = vmul.f32 %v348, %v298
      %v353 = vlaneseq
      %v354 = vshrl.u32 %v353, 7
      %v355 = vsub.s32 1, %v354
      %v356 = vrot.slane %v293, %v355
      %v357 = vlaneseq
      %v358 = vshrl.u32 %v357, 7
      %v359 = vsub.s32 5, %v358
      %v360 = vrot.slane %v293, %v359
      %v361 = vlaneseq
      %v362 = vshrl.u32 %v361, 7
      %v363 = vsub.s32 1, %v362
      %v364 = vrot.slane %v294, %v363
      %v365 = vlaneseq
      %v366 = vshrl.u32 %v365, 7
      %v367 = vsub.s32 5, %v366
      %v368 = vrot.slane %v294, %v367
      %v373 = vlaneseq
      %v374 = vshrl.u32 %v373, 7
      %v375 = vsub.s32 1, %v374
      %v376 = vrot.slane %v356, %v375
      %v377 = vlaneseq
      %v378 = vshrl.u32 %v377, 7
      %v379 = vsub.s32 1, %v378
      %v380 = vrot.slane %v360, %v379
      %v381 = vlaneseq
      %v382 = vshrl.u32 %v381, 7
      %v383 = vsub.s32 1, %v382
      %v384 = vrot.slane %v364, %v383
      %v385 = vlaneseq
      %v386 = vshrl.u32 %v385, 7
      %v387 = vsub.s32 1, %v386
      %v388 = vrot.slane %v368, %v387
      %v389 = vmul.f32 %v376, %v299
      %v390 = vmul.f32 %v380, %v300
      %v391 = vmul.f32 %v384, %v301
      %v392 = vmul.f32 %v388, %v302
      %v393 = vadd.f32 %v349, %v389
      %v394 = vadd.f32 %v350, %v390
      %v395 = vadd.f32 %v351, %v391
      %v396 = vadd.f32 %v352, %v392
      %v397 = vlaneseq
      %v398 = vshrl.u32 %v397, 7
      %v399 = vsub.s32 2, %v398
      %v400 = vrot.slane %v293, %v399
      %v401 = vlaneseq
      %v402 = vshrl.u32 %v401, 7
      %v403 = vsub.s32 6, %v402
      %v404 = vrot.slane %v293, %v403
      %v405 = vlaneseq
      %v406 = vshrl.u32 %v405, 7
      %v407 = vsub.s32 2, %v406
      %v408 = vrot.slane %v294, %v407
      %v409 = vlaneseq
      %v410 = vshrl.u32 %v409, 7
      %v411 = vsub.s32 6, %v410
      %v412 = vrot.slane %v294, %v411
      %v417 = vlaneseq
      %v418 = vshrl.u32 %v417, 7
      %v419 = vsub.s32 2, %v418
      %v420 = vrot.slane %v400, %v419
      %v421 = vlaneseq
      %v422 = vshrl.u32 %v421, 7
      %v423 = vsub.s32 2, %v422
      %v424 = vrot.slane %v404, %v423
      %v425 = vlaneseq
      %v426 = vshrl.u32 %v425, 7
      %v427 = vsub.s32 2, %v426
      %v428 = vrot.slane %v408, %v427
      %v429 = vlaneseq
      %v430 = vshrl.u32 %v429, 7
      %v431 = vsub.s32 2, %v430
      %v432 = vrot.slane %v412, %v431
      %v433 = vmul.f32 %v420, %v303
      %v434 = vmul.f32 %v424, %v304
      %v435 = vmul.f32 %v428, %v305
      %v436 = vmul.f32 %v432, %v306
      %v437 = vadd.f32 %v393, %v433
      %v438 = vadd.f32 %v394, %v434
      %v439 = vadd.f32 %v395, %v435
      %v440 = vadd.f32 %v396, %v436
      %v441 = vlaneseq
      %v442 = vshrl.u32 %v441, 7
      %v443 = vsub.s32 3, %v442
      %v444 = vrot.slane %v293, %v443
      %v445 = vlaneseq
      %v446 = vshrl.u32 %v445, 7
      %v447 = vsub.s32 7, %v446
      %v448 = vrot.slane %v293, %v447
      %v449 = vlaneseq
      %v450 = vshrl.u32 %v449, 7
      %v451 = vsub.s32 3, %v450
      %v452 = vrot.slane %v294, %v451
      %v453 = vlaneseq
      %v454 = vshrl.u32 %v453, 7
      %v455 = vsub.s32 7, %v454
      %v456 = vrot.slane %v294, %v455
      %v461 = vlaneseq
      %v462 = vshrl.u32 %v461, 7
      %v463 = vsub.s32 3, %v462
      %v464 = vrot.slane %v444, %v463
      %v465 = vlaneseq
      %v466 = vshrl.u32 %v465, 7
      %v467 = vsub.s32 3, %v466
      %v468 = vrot.slane %v448, %v467
      %v469 = vlaneseq
      %v470 = vshrl.u32 %v469, 7
      %v471 = vsub.s32 3, %v470
      %v472 = vrot.slane %v452, %v471
      %v473 = vlaneseq
      %v474 = vshrl.u32 %v473, 7
      %v475 = vsub.s32 3, %v474
      %v476 = vrot.slane %v456, %v475
      %v477 = vmul.f32 %v464, %v307
      %v478 = vmul.f32 %v468, %v308
      %v479 = vmul.f32 %v472, %v309
      %v480 = vmul.f32 %v476, %v310
      %v481 = vadd.f32 %v437, %v477
      %v482 = vadd.f32 %v438, %v478
      %v483 = vadd.f32 %v439, %v479
      %v484 = vadd.f32 %v440, %v480
      %p485 = scmp.eq.s32.totalorder %s22, 0
      %p486 = scmp.eq.s32.totalorder %s23, 0
      %p487 = pnand %p485, %p486
      %p488 = pneg %p487
      // Predicated region
      $region41: #{conv_transpose_in_relu.1} parent=39 // pred_check
        _
      $region42: #{conv_transpose_in_relu.1} parent=39 // pred_check_branch
        %490 = sbr.rel (%p487) target = $region44
      $region43: #{conv_transpose_in_relu.1} parent=39 // pred_region
        %vm491 = vcmask 7168
        %492 = vst.msk [vmem:[#allocation2] sm:$0xff] %vm491, 0.0
        %493 = vst.msk [vmem:[#allocation3] sm:$0xff] %vm491, 0.0
      $region44: #{conv_transpose_in_relu.1} parent=39 // pred_fallthru
        _
      // Predicated region
      $region45: #{conv_transpose_in_relu.1} parent=39 // pred_check
        %p494 = pneg %p485
      $region46: #{conv_transpose_in_relu.1} parent=39 // pred_check_branch
        %496 = sbr.rel (%p494) target = $region48
      $region47: #{conv_transpose_in_relu.1} parent=39 // pred_region
        %v497 = vld [vmem:[#allocation2] sm:$0xff]
        %v498 = vadd.f32 %v481, %v482
        %v499 = vadd.f32 %v498, %v483
        %v500 = vadd.f32 %v499, %v484
        %501 = vadd.xlane.f32.xlu0 %v500
        %v502 = vpop.xlane.xlu0 %501
        %v503 = vadd.f32 %v497, %v502
        %vm504 = vcmask 7168
        %505 = vst.msk [vmem:[#allocation2] sm:$0xff] %vm504, %v503
        %v506 = vld [vmem:[#allocation3] sm:$0xff]
        %v507 = vmul.f32 %v481, %v481
        %v508 = vmul.f32 %v482, %v482
        %v509 = vmul.f32 %v483, %v483
        %v510 = vmul.f32 %v484, %v484
        %v511 = vadd.f32 %v507, %v508
        %v512 = vadd.f32 %v511, %v509
        %v513 = vadd.f32 %v512, %v510
        %514 = vadd.xlane.f32.xlu0 %v513
        %v515 = vpop.xlane.xlu0 %514
        %v516 = vadd.f32 %v506, %v515
        %517 = vst.msk [vmem:[#allocation3] sm:$0xff] %vm504, %v516
      $region48: #{conv_transpose_in_relu.1} parent=39 // pred_fallthru
        _
      %p518 = scmp.eq.s32.totalorder %s23, 1
      %p519 = pnand %p485, %p518
      %p520 = pneg %p519
      // Predicated region
      $region49: #{conv_transpose_in_relu.1} parent=39 // pred_check
        _
      $region50: #{conv_transpose_in_relu.1} parent=39 // pred_check_branch
        %522 = sbr.rel (%p519) target = $region52
      $region51: #{conv_transpose_in_relu.1} parent=39 // pred_region
        %v523 = vld [vmem:[#allocation2] sm:$0xff]
        %v524 = vmul.f32 %v523, 0.0009765625
        %v525 = vld [vmem:[#allocation3] sm:$0xff]
        %v526 = vmul.f32 %v525, 0.0009765625
        %v527 = vmul.f32 %v524, %v524
        %v528 = vsub.f32 %v526, %v527
        %v529 = vld [vmem:[%s2] sm:$0xff]
        %v530 = vadd.f32 %v528, 1e-05
        %v531 = vrsqrt.pop %v530
        %v532 = vmul.f32 %v529, %v531
        %vm533 = vcmask 7168
        %534 = vst.msk [vmem:[#allocation4] sm:$0xff] %vm533, %v532
        %v535 = vld [vmem:[%s3] sm:$0xff]
        %v536 = vmul.f32 %v524, %v532
        %v537 = vsub.f32 %v535, %v536
        %538 = vst.msk [vmem:[#allocation5] sm:$0xff] %vm533, %v537
      $region52: #{conv_transpose_in_relu.1} parent=39 // pred_fallthru
        _
      %p539 = scmp.eq.s32.totalorder %s22, 1
      // Predicated region
      $region53: #{conv_transpose_in_relu.1} parent=39 // pred_check
        %p540 = pneg %p539
      $region54: #{conv_transpose_in_relu.1} parent=39 // pred_check_branch
        %542 = sbr.rel (%p540) target = $region56
      $region55: #{conv_transpose_in_relu.1} parent=39 // pred_region
        %v543 = vld [vmem:[#allocation4] sm:$0xff]
        %545 = vset.pattern.permute.xlu0 0
        %546 = vperm.xlu0 %545, %v543
        %v547 = vpop.permute.xlu0 %546
        %v549 = vmul.f32 %v481, %v547
        %v550 = vmul.f32 %v482, %v547
        %v551 = vmul.f32 %v483, %v547
        %v552 = vmul.f32 %v484, %v547
        %v553 = vld [vmem:[#allocation5] sm:$0xff]
        %555 = vset.pattern.permute.xlu0 0
        %556 = vperm.xlu0 %555, %v553
        %v557 = vpop.permute.xlu0 %556
        %v559 = vadd.f32 %v549, %v557
        %v560 = vadd.f32 %v550, %v557
        %v561 = vadd.f32 %v551, %v557
        %v562 = vadd.f32 %v552, %v557
        %v563 = vmax.f32 %v559, 0.0
        %v564 = vmax.f32 %v560, 0.0
        %v565 = vmax.f32 %v561, 0.0
        %v566 = vmax.f32 %v562, 0.0
        %v567 = vld [vmem:[%s280] sm:$0xff]
        %569 = vset.pattern.permute.xlu0 0
        %570 = vperm.xlu0 %569, %v567
        %v571 = vpop.permute.xlu0 %570
        %v573 = vadd.f32 %v563, %v571
        %v574 = vadd.f32 %v564, %v571
        %v575 = vadd.f32 %v565, %v571
        %v576 = vadd.f32 %v566, %v571
        %577 = vst [vmem:[%s290] sm:$0xff] %v573
        %578 = vst [vmem:[%s290 + $0x8] sm:$0xff] %v574
        %579 = vst [vmem:[%s290 + $0x10] sm:$0xff] %v575
        %580 = vst [vmem:[%s290 + $0x18] sm:$0xff] %v576
      $region56: #{conv_transpose_in_relu.1} parent=39 // pred_fallthru
        _
      %s581 = smul.u32 %s22, %s23
      %s582 = smul.u32 4, %s581
      %p583 = scmp.lt.s32.totalorder %s21, 1
      %s584 = scalar_select %p583, %s21, 1
      %p585 = scmp.lt.s32.totalorder %s582, 7
      %s586 = scalar_select %p585, %s582, 7
      %s587 = smul.addr %s584, 8
      %s588 = sadd.s32 %s586, %s587
      %s589 = smul.addr %s588, 8
      %s590 = scalar_lea.vmem %s5, %s589
      // Predicated region
      $region57: #{conv_transpose_in_relu.1} parent=39 // pred_check
        %p591 = pneg %p174
      $region58: #{conv_transpose_in_relu.1} parent=39 // pred_check_branch
        %593 = sbr.rel (%p591) target = $region60
      $region59: #{conv_transpose_in_relu.1} parent=39 // pred_region
        %s594 = smul.u32 %s22, %s23
        %s595 = smul.u32 4, %s594
      $region60: #{conv_transpose_in_relu.1} parent=39 // pred_fallthru
        _
    $region40: #{conv_transpose_in_relu.1} parent=5 // pred_fallthru
      _
    %p596 = scmp.le.s32.totalorder 2, %s11
    // Predicated region
    $region61: #{conv_transpose_in_relu.1} parent=5 // pred_check
      %p597 = pneg %p596
    $region62: #{conv_transpose_in_relu.1} parent=5 // pred_check_branch
      %599 = sbr.rel (%p597) target = $region64
    $region63: #{conv_transpose_in_relu.1} parent=5 // pred_region
      %s600 = ssub.s32 %s11, 2
      // Predicated region
      $region65: #{conv_transpose_in_relu.1} parent=63 // pred_check
        %p601 = pneg %p180
      $region66: #{conv_transpose_in_relu.1} parent=63 // pred_check_branch
        %603 = sbr.rel (%p601) target = $region68
      $region67: #{conv_transpose_in_relu.1} parent=63 // pred_region
        %s604 = smul.u32 %s25, %s26
        %s605 = smul.u32 4, %s604
        %p606 = scmp.lt.s32.totalorder %s24, 1
        %s607 = scalar_select %p606, %s24, 1
        %p608 = scmp.lt.s32.totalorder %s605, 7
        %s609 = scalar_select %p608, %s605, 7
        %s610 = smul.addr %s607, 8
        %s611 = sadd.s32 %s609, %s610
        %s612 = smul.addr %s611, 8
        %s613 = scalar_lea.vmem %s5, %s612
      $region68: #{conv_transpose_in_relu.1} parent=63 // pred_fallthru
        _
    $region64: #{conv_transpose_in_relu.1} parent=5 // pred_fallthru
      _
  $region6: #{conv_transpose_in_relu.1} parent=0 // loop_footer
    %s15 = sadd.s32 1, %s11
  $region7: #{conv_transpose_in_relu.1} parent=0 // loop_footer_branch
    %10 = sbr.rel target = $region3
  $region8: #{conv_transpose_in_relu.1} parent=0 // loop_exit
    _

</llo_original>
